<compile_context>
chip_gen: v7x
topology: tpu7x:2x2x1
jax: 0.10.0
libtpu: 0.0.40
codegen_flags: <defaults>
</compile_context>

<pallas_src>
import jax
import jax.numpy as jnp
from jax.experimental import pallas as pl
from jax.experimental.pallas import tpu as pltpu

K1_PAD = 896    # 784 -> 7 * 128 (lane-aligned K for matmul-1)
N3_PAD = 128    # 10  -> 128     (lane-dense output / clean MXU N tile for matmul-3)


def _mlp_kernel(x_ref, w1_ref, b1_ref, w2_ref, b2_ref, w3_ref, b3_ref, o_ref):
    # x_ref: (TB, 896) bf16; w*: bf16; b*: f32; o_ref: (TB, 128) f32.
    # MXU matmuls accumulate in f32; bias add + ReLU are done in f32 on the VPU.
    h1 = jnp.dot(x_ref[...], w1_ref[...], preferred_element_type=jnp.float32) + b1_ref[...]
    h1 = jnp.maximum(h1, 0.0)
    h2 = jnp.dot(h1.astype(jnp.bfloat16), w2_ref[...],
                 preferred_element_type=jnp.float32) + b2_ref[...]
    h2 = jnp.maximum(h2, 0.0)
    o_ref[...] = jnp.dot(h2.astype(jnp.bfloat16), w3_ref[...],
                         preferred_element_type=jnp.float32) + b3_ref[...]


def _round_up(n, m):
    return ((n + m - 1) // m) * m


def two_layer_fc_forward(x, params):
    """x: (B, 1, 28, 28) or (B, 784) float32. Returns (B, 10) float32."""
    w1, b1, w2, b2, w3, b3 = params            # w: (in, out), b: (1, out), all f32
    B = x.shape[0]
    x_flat = x.reshape(B, -1)                  # row-major flatten == torch .view(B, -1)
    assert x_flat.shape[1] == 784

    # Batch tile: multiple of 16 (bf16 sublane packing), capped at 256 (fills MXU M on v6e/v7x).
    TB = min(256, _round_up(B, 16))
    B_pad = _round_up(B, TB)
    grid = (B_pad // TB,)

    # Zero-pad: batch -> B_pad, first-layer K 784 -> 896, final N 10 -> 128.
    # Padded K columns / N columns are zero, so results for real rows/cols are unchanged.
    x_pad = jnp.zeros((B_pad, K1_PAD), jnp.float32).at[:B, :784].set(x_flat)
    w1_pad = jnp.zeros((K1_PAD, 128), jnp.float32).at[:784, :].set(w1)
    w3_pad = jnp.zeros((64, N3_PAD), jnp.float32).at[:, :10].set(w3)
    b3_pad = jnp.zeros((1, N3_PAD), jnp.float32).at[:, :10].set(b3)

    # bf16 matmul operands (halves HBM/VMEM traffic); accumulation stays f32 in-kernel.
    x_bf = x_pad.astype(jnp.bfloat16)
    w1_bf = w1_pad.astype(jnp.bfloat16)
    w2_bf = w2.astype(jnp.bfloat16)
    w3_bf = w3_pad.astype(jnp.bfloat16)

    resident = lambda shape: pl.BlockSpec(shape, lambda i: (0, 0))   # fetched once, stays in VMEM

    # VMEM budget: double-buffered x tile + out tile + resident weights/biases (+ headroom).
    vmem_bytes = (2 * TB * K1_PAD * 2                                    # x tile (bf16), 2 bufs
                  + 2 * TB * N3_PAD * 4                                  # out tile (f32), 2 bufs
                  + 2 * (K1_PAD * 128 + 128 * 64 + 64 * N3_PAD) * 2      # weights (bf16)
                  + 2 * (128 + 64 + N3_PAD) * 4)                         # biases (f32)
    vmem_bytes = max(2 * vmem_bytes + (2 << 20), 8 << 20)

    flops = 2 * B_pad * (K1_PAD * 128 + 128 * 64 + 64 * N3_PAD)
    bytes_accessed = (x_bf.size * 2 + w1_bf.size * 2 + w2_bf.size * 2 + w3_bf.size * 2
                      + (b1.size + b2.size + b3_pad.size) * 4
                      + B_pad * N3_PAD * 4)

    out_pad = pl.pallas_call(
        _mlp_kernel,
        out_shape=jax.ShapeDtypeStruct((B_pad, N3_PAD), jnp.float32),
        grid=grid,
        in_specs=[
            pl.BlockSpec((TB, K1_PAD), lambda i: (i, 0)),   # x: tiled over batch
            resident((K1_PAD, 128)), resident((1, 128)),    # fc1
            resident((128, 64)),     resident((1, 64)),     # fc2
            resident((64, N3_PAD)),  resident((1, N3_PAD)), # fc3 (lane-padded)
        ],
        out_specs=pl.BlockSpec((TB, N3_PAD), lambda i: (i, 0)),
        compiler_params=pltpu.CompilerParams(
            dimension_semantics=("parallel",),              # shard batch tiles across TCs (v7x)
            vmem_limit_bytes=int(vmem_bytes)),
        cost_estimate=pl.CostEstimate(flops=flops, transcendentals=0,
                                      bytes_accessed=int(bytes_accessed)),
    )(x_bf, w1_bf, b1, w2_bf, b2, w3_bf, b3_pad)

    return out_pad[:B, :10]


def init_params(key):
    """Deterministic init mimicking nn.Linear's uniform(-1/sqrt(fan_in), 1/sqrt(fan_in)).

    Weights are stored as (in_features, out_features)."""
    dims = [(784, 128), (128, 64), (64, 10)]
    params = []
    for (fan_in, fan_out) in dims:
        key, kw, kb = jax.random.split(key, 3)
        bound = 1.0 / jnp.sqrt(jnp.float32(fan_in))
        w = jax.random.uniform(kw, (fan_in, fan_out), jnp.float32, -bound, bound)
        b = jax.random.uniform(kb, (1, fan_out), jnp.float32, -bound, bound)
        params += [w, b]
    return tuple(params)


def reference_forward(x, params):
    """Pure-JAX f32 reference (matches the PyTorch module)."""
    w1, b1, w2, b2, w3, b3 = params
    h = x.reshape(x.shape[0], -1)
    h = jnp.maximum(h @ w1 + b1, 0.0)
    h = jnp.maximum(h @ w2 + b2, 0.0)
    return h @ w3 + b3


if __name__ == "__main__":
    key = jax.random.PRNGKey(0)
    key, kx1, kx2 = jax.random.split(key, 3)
    params = init_params(key)

    # Small case (single tile) — matches the module's MNIST-style NCHW input.
    B1 = 8
    x1 = jax.random.normal(kx1, (B1, 1, 28, 28), jnp.float32)
    out1 = jax.block_until_ready(two_layer_fc_forward(x1, params))
    ref1 = reference_forward(x1, params)
    assert out1.shape == (B1, 10), out1.shape
    assert jnp.allclose(out1, ref1, atol=5e-2, rtol=5e-2), "mismatch vs. f32 reference (B=8)"

    # Multi-tile case — exercises the batch-tiled grid + tail padding.
    B2 = 520
    x2 = jax.random.normal(kx2, (B2, 1, 28, 28), jnp.float32)
    out2 = jax.block_until_ready(two_layer_fc_forward(x2, params))
    ref2 = reference_forward(x2, params)
    assert out2.shape == (B2, 10), out2.shape
    assert jnp.allclose(out2, ref2, atol=5e-2, rtol=5e-2), "mismatch vs. f32 reference (B=520)"

    print("KERNEL_OK")
</pallas_src>

<mosaic_0001>
module attributes {stable_mosaic.version = 11 : i64} {
  func.func @_mlp_kernel(%arg0: i32, %arg1: memref<16x896xbf16, #tpu.memory_space<vmem>>, %arg2: memref<896x128xbf16, #tpu.memory_space<vmem>>, %arg3: memref<1x128xf32, #tpu.memory_space<vmem>>, %arg4: memref<128x64xbf16, #tpu.memory_space<vmem>>, %arg5: memref<1x64xf32, #tpu.memory_space<vmem>>, %arg6: memref<64x128xbf16, #tpu.memory_space<vmem>>, %arg7: memref<1x128xf32, #tpu.memory_space<vmem>>, %arg8: memref<16x128xf32, #tpu.memory_space<vmem>>) attributes {dimension_semantics = [#tpu.dimension_semantics<parallel>], iteration_bounds = array<i64: 1>, scalar_prefetch = 0 : i64, scratch_operands = 0 : i64, tpu.core_type = #tpu.core_type<tc>, window_params = [{transform_indices = @transform_0, window_bounds = array<i64: 16, 896>}, {pipeline_mode = #tpu.pipeline_mode<synchronous>, transform_indices = @transform_1, window_bounds = array<i64: 896, 128>}, {pipeline_mode = #tpu.pipeline_mode<synchronous>, transform_indices = @transform_2, window_bounds = array<i64: 1, 128>}, {pipeline_mode = #tpu.pipeline_mode<synchronous>, transform_indices = @transform_3, window_bounds = array<i64: 128, 64>}, {pipeline_mode = #tpu.pipeline_mode<synchronous>, transform_indices = @transform_4, window_bounds = array<i64: 1, 64>}, {pipeline_mode = #tpu.pipeline_mode<synchronous>, transform_indices = @transform_5, window_bounds = array<i64: 64, 128>}, {pipeline_mode = #tpu.pipeline_mode<synchronous>, transform_indices = @transform_6, window_bounds = array<i64: 1, 128>}, {transform_indices = @transform_7, window_bounds = array<i64: 16, 128>}]} {
    %c0 = arith.constant 0 : index
    %c0_0 = arith.constant 0 : index
    %0 = vector.load %arg1[%c0, %c0_0] : memref<16x896xbf16, #tpu.memory_space<vmem>>, vector<16x896xbf16>
    %c0_1 = arith.constant 0 : index
    %c0_2 = arith.constant 0 : index
    %1 = vector.load %arg2[%c0_1, %c0_2] : memref<896x128xbf16, #tpu.memory_space<vmem>>, vector<896x128xbf16>
    %cst = arith.constant dense<0.000000e+00> : vector<16x128xf32>
    %2 = tpu.matmul %0, %1, %cst {dimension_numbers = #tpu.dot_dimension_numbers<[1], [0], [0], [1], [0, 0, 1, 1], [], []>} : vector<16x896xbf16>, vector<896x128xbf16>, vector<16x128xf32> -> vector<16x128xf32>
    %c0_3 = arith.constant 0 : index
    %c0_4 = arith.constant 0 : index
    %3 = vector.load %arg3[%c0_3, %c0_4] : memref<1x128xf32, #tpu.memory_space<vmem>>, vector<1x128xf32>
    %4 = vector.broadcast %3 : vector<1x128xf32> to vector<16x128xf32>
    %5 = arith.addf %2, %4 : vector<16x128xf32>
    %cst_5 = arith.constant 0.000000e+00 : f32
    %6 = vector.broadcast %cst_5 : f32 to vector<16x128xf32>
    %7 = arith.maximumf %5, %6 : vector<16x128xf32>
    %8 = arith.truncf %7 : vector<16x128xf32> to vector<16x128xbf16>
    %c0_6 = arith.constant 0 : index
    %c0_7 = arith.constant 0 : index
    %9 = vector.load %arg4[%c0_6, %c0_7] : memref<128x64xbf16, #tpu.memory_space<vmem>>, vector<128x64xbf16>
    %cst_8 = arith.constant dense<0.000000e+00> : vector<16x64xf32>
    %10 = tpu.matmul %8, %9, %cst_8 {dimension_numbers = #tpu.dot_dimension_numbers<[1], [0], [0], [1], [0, 0, 1, 1], [], []>} : vector<16x128xbf16>, vector<128x64xbf16>, vector<16x64xf32> -> vector<16x64xf32>
    %c0_9 = arith.constant 0 : index
    %c0_10 = arith.constant 0 : index
    %11 = vector.load %arg5[%c0_9, %c0_10] : memref<1x64xf32, #tpu.memory_space<vmem>>, vector<1x64xf32>
    %12 = vector.broadcast %11 : vector<1x64xf32> to vector<16x64xf32>
    %13 = arith.addf %10, %12 : vector<16x64xf32>
    %cst_11 = arith.constant 0.000000e+00 : f32
    %14 = vector.broadcast %cst_11 : f32 to vector<16x64xf32>
    %15 = arith.maximumf %13, %14 : vector<16x64xf32>
    %16 = arith.truncf %15 : vector<16x64xf32> to vector<16x64xbf16>
    %c0_12 = arith.constant 0 : index
    %c0_13 = arith.constant 0 : index
    %17 = vector.load %arg6[%c0_12, %c0_13] : memref<64x128xbf16, #tpu.memory_space<vmem>>, vector<64x128xbf16>
    %cst_14 = arith.constant dense<0.000000e+00> : vector<16x128xf32>
    %18 = tpu.matmul %16, %17, %cst_14 {dimension_numbers = #tpu.dot_dimension_numbers<[1], [0], [0], [1], [0, 0, 1, 1], [], []>} : vector<16x64xbf16>, vector<64x128xbf16>, vector<16x128xf32> -> vector<16x128xf32>
    %c0_15 = arith.constant 0 : index
    %c0_16 = arith.constant 0 : index
    %19 = vector.load %arg7[%c0_15, %c0_16] : memref<1x128xf32, #tpu.memory_space<vmem>>, vector<1x128xf32>
    %20 = vector.broadcast %19 : vector<1x128xf32> to vector<16x128xf32>
    %21 = arith.addf %18, %20 : vector<16x128xf32>
    %c0_17 = arith.constant 0 : index
    %c0_18 = arith.constant 0 : index
    %22 = vector.load %arg8[%c0_17, %c0_18] : memref<16x128xf32, #tpu.memory_space<vmem>>, vector<16x128xf32>
    tpu.vector_store %arg8[%c0_17, %c0_18], %21 {strides = array<i32>} : memref<16x128xf32, #tpu.memory_space<vmem>>, vector<16x128xf32>,
    return
  }
  func.func @transform_0(%arg0: i32) -> (i32, i32) {
    %c0_i32 = arith.constant 0 : i32
    %c0_i32_0 = arith.constant 0 : i32
    return %arg0, %c0_i32 : i32, i32
  }
  func.func @transform_1(%arg0: i32) -> (i32, i32) {
    %c0_i32 = arith.constant 0 : i32
    %c0_i32_0 = arith.constant 0 : i32
    %c0_i32_1 = arith.constant 0 : i32
    return %c0_i32, %c0_i32_0 : i32, i32
  }
  func.func @transform_2(%arg0: i32) -> (i32, i32) {
    %c0_i32 = arith.constant 0 : i32
    %c0_i32_0 = arith.constant 0 : i32
    %c0_i32_1 = arith.constant 0 : i32
    return %c0_i32, %c0_i32_0 : i32, i32
  }
  func.func @transform_3(%arg0: i32) -> (i32, i32) {
    %c0_i32 = arith.constant 0 : i32
    %c0_i32_0 = arith.constant 0 : i32
    %c0_i32_1 = arith.constant 0 : i32
    return %c0_i32, %c0_i32_0 : i32, i32
  }
  func.func @transform_4(%arg0: i32) -> (i32, i32) {
    %c0_i32 = arith.constant 0 : i32
    %c0_i32_0 = arith.constant 0 : i32
    %c0_i32_1 = arith.constant 0 : i32
    return %c0_i32, %c0_i32_0 : i32, i32
  }
  func.func @transform_5(%arg0: i32) -> (i32, i32) {
    %c0_i32 = arith.constant 0 : i32
    %c0_i32_0 = arith.constant 0 : i32
    %c0_i32_1 = arith.constant 0 : i32
    return %c0_i32, %c0_i32_0 : i32, i32
  }
  func.func @transform_6(%arg0: i32) -> (i32, i32) {
    %c0_i32 = arith.constant 0 : i32
    %c0_i32_0 = arith.constant 0 : i32
    %c0_i32_1 = arith.constant 0 : i32
    return %c0_i32, %c0_i32_0 : i32, i32
  }
  func.func @transform_7(%arg0: i32) -> (i32, i32) {
    %c0_i32 = arith.constant 0 : i32
    %c0_i32_0 = arith.constant 0 : i32
    return %arg0, %c0_i32 : i32, i32
  }
}

</mosaic_0001>

<llo_original>
// kernel: tpu_custom_call.1
$region0: #{tpu_custom_call.1}
  #allocation0 [shape = 'u32[]', space=smem, size = 0x4, offset = 0x4, fixed_abs, tag = 'smem constant byte address 0x4 - core index']
  #allocation1 [shape = 'u32[144,128]{1,0:T(1,128)}', space=vmem, size = 0x12000, scoped, tag = 'internal scratch']
  %s0 = inlined_call_operand.vmem [shape: bf16[16,896], index: 0, kind: input, shape index: {}]
  %s1 = inlined_call_operand.hbm [shape: bf16[896,128], index: 1, kind: input, shape index: {}]
  %s2 = inlined_call_operand.vmem [shape: f32[1,128], index: 2, kind: input, shape index: {}]
  %s3 = inlined_call_operand.vmem [shape: bf16[128,64], index: 3, kind: input, shape index: {}]
  %s4 = inlined_call_operand.vmem [shape: f32[1,64], index: 4, kind: input, shape index: {}]
  %s5 = inlined_call_operand.vmem [shape: bf16[64,128], index: 5, kind: input, shape index: {}]
  %s6 = inlined_call_operand.vmem [shape: f32[1,128], index: 6, kind: input, shape index: {}]
  %s7 = inlined_call_operand.hbm [shape: f32[16,128], index: 7, kind: output, shape index: {}]
  %s8 = sld [smem:[#allocation0]]
  $region42: #{tpu_custom_call.1} parent=0
    _
  %s10 = ssub.s32 1, %s8
  %s11 = scalar_select 0, %s10, %s8
  $region1: #{tpu_custom_call.1} parent=0
    #allocation2 [shape = 'u8[229376]{0}', space=vmem, size = 0x38000, scoped, tag = 'input window, operand 1, single buffered']
    #allocation3 [shape = 's32[1]{0}', space=sflag, size = 0x4, scoped, tag = 'scoped memory for tpu_custom_call.1']
    #allocation4 [shape = 's32[1]{0}', space=sflag, size = 0x4, scoped, tag = 'scoped memory for tpu_custom_call.1']
    #allocation5 [shape = 'u8[8192]{0}', space=vmem, size = 0x2000, scoped, tag = 'output window, operand 0, single buffered']
    %12 = vsyncpa [#allocation3], 0
    %13 = vsyncpa [#allocation4], 0
    // Predicated region
    $region2: #{tpu_custom_call.1} parent=1 // pred_check
      _
    $region3: #{tpu_custom_call.1} parent=1 // pred_check_branch
      %15 = sbr.rel (0) target = $region5
    $region4: #{tpu_custom_call.1} parent=1 // pred_region
      _
    $region5: #{tpu_custom_call.1} parent=1 // pred_fallthru
      _
    // Predicated region
    $region6: #{tpu_custom_call.1} parent=1 // pred_check
      _
    $region7: #{tpu_custom_call.1} parent=1 // pred_check_branch
      %17 = sbr.rel (0) target = $region9
    $region8: #{tpu_custom_call.1} parent=1 // pred_region
      %s19 = ssub.s32 7168, 7168
      %20 = vsyncadd [#allocation3], %s19
      %s21 = sshll.u32 [#allocation2], 4
      %s22 = int_to_ptr.vmem [resolvable:$true] %s21
      %27 = dma.hbm_to_vmem [thread:$0]  %s1, 7168, %s22, [#allocation3], 64, 64, 4
    $region9: #{tpu_custom_call.1} parent=1 // pred_fallthru
      _
    // Predicated region
    $region10: #{tpu_custom_call.1} parent=1 // pred_check
      _
    $region11: #{tpu_custom_call.1} parent=1 // pred_check_branch
      %29 = sbr.rel (0) target = $region13
    $region12: #{tpu_custom_call.1} parent=1 // pred_region
      _
    $region13: #{tpu_custom_call.1} parent=1 // pred_fallthru
      _
    // Predicated region
    $region14: #{tpu_custom_call.1} parent=1 // pred_check
      _
    $region15: #{tpu_custom_call.1} parent=1 // pred_check_branch
      %31 = sbr.rel (0) target = $region17
    $region16: #{tpu_custom_call.1} parent=1 // pred_region
      _
    $region17: #{tpu_custom_call.1} parent=1 // pred_fallthru
      _
    // Predicated region
    $region18: #{tpu_custom_call.1} parent=1 // pred_check
      _
    $region19: #{tpu_custom_call.1} parent=1 // pred_check_branch
      %33 = sbr.rel (0) target = $region21
    $region20: #{tpu_custom_call.1} parent=1 // pred_region
      _
    $region21: #{tpu_custom_call.1} parent=1 // pred_fallthru
      _
    // Predicated region
    $region22: #{tpu_custom_call.1} parent=1 // pred_check
      _
    $region23: #{tpu_custom_call.1} parent=1 // pred_check_branch
      %35 = sbr.rel (0) target = $region25
    $region24: #{tpu_custom_call.1} parent=1 // pred_region
      _
    $region25: #{tpu_custom_call.1} parent=1 // pred_fallthru
      _
    // Predicated region
    $region26: #{tpu_custom_call.1} parent=1 // pred_check
      _
    $region27: #{tpu_custom_call.1} parent=1 // pred_check_branch
      %37 = sbr.rel (0) target = $region29
    $region28: #{tpu_custom_call.1} parent=1 // pred_region
      _
    $region29: #{tpu_custom_call.1} parent=1 // pred_fallthru
      _
    // Predicated region
    $region30: #{tpu_custom_call.1} parent=1 // pred_check
      _
    $region31: #{tpu_custom_call.1} parent=1 // pred_check_branch
      %39 = sbr.rel (0) target = $region33
    $region32: #{tpu_custom_call.1} parent=1 // pred_region
      %40 = dma.done [#allocation3], 7168
    $region33: #{tpu_custom_call.1} parent=1 // pred_fallthru
      _
    %v42 = vld [vmem:[%s0] sm:$0xff]
    %v43 = vld [vmem:[%s0 + $0x8] sm:$0xff]
    %v44 = vld [vmem:[%s0 + $0x10] sm:$0xff]
    %v45 = vld [vmem:[%s0 + $0x18] sm:$0xf]
    %v46 = vld [vmem:[%s0 + $0x1c] sm:$0xff]
    %v47 = vld [vmem:[%s0 + $0x24] sm:$0xff]
    %v48 = vld [vmem:[%s0 + $0x2c] sm:$0xff]
    %v49 = vld [vmem:[%s0 + $0x34] sm:$0xf]
    %v50 = vld [vmem:[#allocation2] sm:$0xf]
    %v51 = vld [vmem:[#allocation2 + $0x4] sm:$0xf]
    %v52 = vld [vmem:[#allocation2 + $0x8] sm:$0xf]
    %v53 = vld [vmem:[#allocation2 + $0xc] sm:$0xf]
    %v54 = vld [vmem:[#allocation2 + $0x10] sm:$0xf]
    %v55 = vld [vmem:[#allocation2 + $0x14] sm:$0xf]
    %v56 = vld [vmem:[#allocation2 + $0x18] sm:$0xf]
    %v57 = vld [vmem:[#allocation2 + $0x1c] sm:$0xf]
    %v58 = vld [vmem:[#allocation2 + $0x20] sm:$0xf]
    %v59 = vld [vmem:[#allocation2 + $0x24] sm:$0xf]
    %v60 = vld [vmem:[#allocation2 + $0x28] sm:$0xf]
    %v61 = vld [vmem:[#allocation2 + $0x2c] sm:$0xf]
    %v62 = vld [vmem:[#allocation2 + $0x30] sm:$0xf]
    %v63 = vld [vmem:[#allocation2 + $0x34] sm:$0xf]
    %v64 = vld [vmem:[#allocation2 + $0x38] sm:$0xf]
    %v65 = vld [vmem:[#allocation2 + $0x3c] sm:$0xf]
    %v66 = vld [vmem:[#allocation2 + $0x40] sm:$0xf]
    %v67 = vld [vmem:[#allocation2 + $0x44] sm:$0xf]
    %v68 = vld [vmem:[#allocation2 + $0x48] sm:$0xf]
    %v69 = vld [vmem:[#allocation2 + $0x4c] sm:$0xf]
    %v70 = vld [vmem:[#allocation2 + $0x50] sm:$0xf]
    %v71 = vld [vmem:[#allocation2 + $0x54] sm:$0xf]
    %v72 = vld [vmem:[#allocation2 + $0x58] sm:$0xf]
    %v73 = vld [vmem:[#allocation2 + $0x5c] sm:$0xf]
    %v74 = vld [vmem:[#allocation2 + $0x60] sm:$0xf]
    %v75 = vld [vmem:[#allocation2 + $0x64] sm:$0xf]
    %v76 = vld [vmem:[#allocation2 + $0x68] sm:$0xf]
    %v77 = vld [vmem:[#allocation2 + $0x6c] sm:$0xf]
    %v78 = vld [vmem:[#allocation2 + $0x70] sm:$0xf]
    %v79 = vld [vmem:[#allocation2 + $0x74] sm:$0xf]
    %v80 = vld [vmem:[#allocation2 + $0x78] sm:$0xf]
    %v81 = vld [vmem:[#allocation2 + $0x7c] sm:$0xf]
    %v82 = vld [vmem:[#allocation2 + $0x80] sm:$0xf]
    %v83 = vld [vmem:[#allocation2 + $0x84] sm:$0xf]
    %v84 = vld [vmem:[#allocation2 + $0x88] sm:$0xf]
    %v85 = vld [vmem:[#allocation2 + $0x8c] sm:$0xf]
    %v86 = vld [vmem:[#allocation2 + $0x90] sm:$0xf]
    %v87 = vld [vmem:[#allocation2 + $0x94] sm:$0xf]
    %v88 = vld [vmem:[#allocation2 + $0x98] sm:$0xf]
    %v89 = vld [vmem:[#allocation2 + $0x9c] sm:$0xf]
    %v90 = vld [vmem:[#allocation2 + $0xa0] sm:$0xf]
    %v91 = vld [vmem:[#allocation2 + $0xa4] sm:$0xf]
    %v92 = vld [vmem:[#allocation2 + $0xa8] sm:$0xf]
    %v93 = vld [vmem:[#allocation2 + $0xac] sm:$0xf]
    %v94 = vld [vmem:[#allocation2 + $0xb0] sm:$0xf]
    %v95 = vld [vmem:[#allocation2 + $0xb4] sm:$0xf]
    %v96 = vld [vmem:[#allocation2 + $0xb8] sm:$0xf]
    %v97 = vld [vmem:[#allocation2 + $0xbc] sm:$0xf]
    %v98 = vld [vmem:[#allocation2 + $0xc0] sm:$0xf]
    %v99 = vld [vmem:[#allocation2 + $0xc4] sm:$0xf]
    %v100 = vld [vmem:[#allocation2 + $0xc8] sm:$0xf]
    %v101 = vld [vmem:[#allocation2 + $0xcc] sm:$0xf]
    %v102 = vld [vmem:[#allocation2 + $0xd0] sm:$0xf]
    %v103 = vld [vmem:[#allocation2 + $0xd4] sm:$0xf]
    %v104 = vld [vmem:[#allocation2 + $0xd8] sm:$0xf]
    %v105 = vld [vmem:[#allocation2 + $0xdc] sm:$0xf]
    %v106 = vld [vmem:[#allocation2 + $0xe0] sm:$0xf]
    %v107 = vld [vmem:[#allocation2 + $0xe4] sm:$0xf]
    %v108 = vld [vmem:[#allocation2 + $0xe8] sm:$0xf]
    %v109 = vld [vmem:[#allocation2 + $0xec] sm:$0xf]
    %v110 = vld [vmem:[#allocation2 + $0xf0] sm:$0xf]
    %v111 = vld [vmem:[#allocation2 + $0xf4] sm:$0xf]
    %v112 = vld [vmem:[#allocation2 + $0xf8] sm:$0xf]
    %v113 = vld [vmem:[#allocation2 + $0xfc] sm:$0xf]
    %v114 = vld [vmem:[#allocation2 + $0x100] sm:$0xf]
    %v115 = vld [vmem:[#allocation2 + $0x104] sm:$0xf]
    %v116 = vld [vmem:[#allocation2 + $0x108] sm:$0xf]
    %v117 = vld [vmem:[#allocation2 + $0x10c] sm:$0xf]
    %v118 = vld [vmem:[#allocation2 + $0x110] sm:$0xf]
    %v119 = vld [vmem:[#allocation2 + $0x114] sm:$0xf]
    %v120 = vld [vmem:[#allocation2 + $0x118] sm:$0xf]
    %v121 = vld [vmem:[#allocation2 + $0x11c] sm:$0xf]
    %v122 = vld [vmem:[#allocation2 + $0x120] sm:$0xf]
    %v123 = vld [vmem:[#allocation2 + $0x124] sm:$0xf]
    %v124 = vld [vmem:[#allocation2 + $0x128] sm:$0xf]
    %v125 = vld [vmem:[#allocation2 + $0x12c] sm:$0xf]
    %v126 = vld [vmem:[#allocation2 + $0x130] sm:$0xf]
    %v127 = vld [vmem:[#allocation2 + $0x134] sm:$0xf]
    %v128 = vld [vmem:[#allocation2 + $0x138] sm:$0xf]
    %v129 = vld [vmem:[#allocation2 + $0x13c] sm:$0xf]
    %v130 = vld [vmem:[#allocation2 + $0x140] sm:$0xf]
    %v131 = vld [vmem:[#allocation2 + $0x144] sm:$0xf]
    %v132 = vld [vmem:[#allocation2 + $0x148] sm:$0xf]
    %v133 = vld [vmem:[#allocation2 + $0x14c] sm:$0xf]
    %v134 = vld [vmem:[#allocation2 + $0x150] sm:$0xf]
    %v135 = vld [vmem:[#allocation2 + $0x154] sm:$0xf]
    %v136 = vld [vmem:[#allocation2 + $0x158] sm:$0xf]
    %v137 = vld [vmem:[#allocation2 + $0x15c] sm:$0xf]
    %v138 = vld [vmem:[#allocation2 + $0x160] sm:$0xf]
    %v139 = vld [vmem:[#allocation2 + $0x164] sm:$0xf]
    %v140 = vld [vmem:[#allocation2 + $0x168] sm:$0xf]
    %v141 = vld [vmem:[#allocation2 + $0x16c] sm:$0xf]
    %v142 = vld [vmem:[#allocation2 + $0x170] sm:$0xf]
    %v143 = vld [vmem:[#allocation2 + $0x174] sm:$0xf]
    %v144 = vld [vmem:[#allocation2 + $0x178] sm:$0xf]
    %v145 = vld [vmem:[#allocation2 + $0x17c] sm:$0xf]
    %v146 = vld [vmem:[#allocation2 + $0x180] sm:$0xf]
    %v147 = vld [vmem:[#allocation2 + $0x184] sm:$0xf]
    %v148 = vld [vmem:[#allocation2 + $0x188] sm:$0xf]
    %v149 = vld [vmem:[#allocation2 + $0x18c] sm:$0xf]
    %v150 = vld [vmem:[#allocation2 + $0x190] sm:$0xf]
    %v151 = vld [vmem:[#allocation2 + $0x194] sm:$0xf]
    %v152 = vld [vmem:[#allocation2 + $0x198] sm:$0xf]
    %v153 = vld [vmem:[#allocation2 + $0x19c] sm:$0xf]
    %v154 = vld [vmem:[#allocation2 + $0x1a0] sm:$0xf]
    %v155 = vld [vmem:[#allocation2 + $0x1a4] sm:$0xf]
    %v156 = vld [vmem:[#allocation2 + $0x1a8] sm:$0xf]
    %v157 = vld [vmem:[#allocation2 + $0x1ac] sm:$0xf]
    %v158 = vld [vmem:[#allocation2 + $0x1b0] sm:$0xf]
    %v159 = vld [vmem:[#allocation2 + $0x1b4] sm:$0xf]
    %v160 = vld [vmem:[#allocation2 + $0x1b8] sm:$0xf]
    %v161 = vld [vmem:[#allocation2 + $0x1bc] sm:$0xf]
    %v162 = vld [vmem:[%s2] sm:$0x1]
    %v164 = vlaneseq
    %v165 = vshrl.u32 %v164, 7
    %v166 = vsub.s32 0, %v165
    %v167 = vrot.slane %v162, %v166
    %v177 = vunpack.c.l.b16 %v42
    %v178 = vunpack.c.h.b16 %v42
    %v179 = vunpack.c.l.b16 %v43
    %v180 = vunpack.c.h.b16 %v43
    %v181 = vunpack.c.l.b16 %v44
    %v182 = vunpack.c.h.b16 %v44
    %v183 = vunpack.c.l.b16 %v45
    %v184 = vunpack.c.l.b16 %v46
    %v185 = vunpack.c.h.b16 %v46
    %v186 = vunpack.c.l.b16 %v47
    %v187 = vunpack.c.h.b16 %v47
    %v188 = vunpack.c.l.b16 %v48
    %v189 = vunpack.c.h.b16 %v48
    %v190 = vunpack.c.l.b16 %v49
    %v191 = vpack.c.b16 %v184, %v177
    %v192 = vpack.c.b16 %v185, %v178
    %v193 = vpack.c.b16 %v186, %v179
    %v194 = vpack.c.b16 %v187, %v180
    %v195 = vpack.c.b16 %v188, %v181
    %v196 = vpack.c.b16 %v189, %v182
    %v197 = vpack.c.b16 %v190, %v183
    %v317 = vunpack.c.l.b16 %v50
    %v318 = vunpack.c.l.b16 %v51
    %v319 = vunpack.c.l.b16 %v52
    %v320 = vunpack.c.l.b16 %v53
    %v321 = vunpack.c.l.b16 %v54
    %v322 = vunpack.c.l.b16 %v55
    %v323 = vunpack.c.l.b16 %v56
    %v324 = vunpack.c.l.b16 %v57
    %v325 = vunpack.c.l.b16 %v58
    %v326 = vunpack.c.l.b16 %v59
    %v327 = vunpack.c.l.b16 %v60
    %v328 = vunpack.c.l.b16 %v61
    %v329 = vunpack.c.l.b16 %v62
    %v330 = vunpack.c.l.b16 %v63
    %v331 = vunpack.c.l.b16 %v64
    %v332 = vunpack.c.l.b16 %v65
    %v333 = vunpack.c.l.b16 %v66
    %v334 = vunpack.c.l.b16 %v67
    %v335 = vunpack.c.l.b16 %v68
    %v336 = vunpack.c.l.b16 %v69
    %v337 = vunpack.c.l.b16 %v70
    %v338 = vunpack.c.l.b16 %v71
    %v339 = vunpack.c.l.b16 %v72
    %v340 = vunpack.c.l.b16 %v73
    %v341 = vunpack.c.l.b16 %v74
    %v342 = vunpack.c.l.b16 %v75
    %v343 = vunpack.c.l.b16 %v76
    %v344 = vunpack.c.l.b16 %v77
    %v345 = vunpack.c.l.b16 %v78
    %v346 = vunpack.c.l.b16 %v79
    %v347 = vunpack.c.l.b16 %v80
    %v348 = vunpack.c.l.b16 %v81
    %v349 = vunpack.c.l.b16 %v82
    %v350 = vunpack.c.l.b16 %v83
    %v351 = vunpack.c.l.b16 %v84
    %v352 = vunpack.c.l.b16 %v85
    %v353 = vunpack.c.l.b16 %v86
    %v354 = vunpack.c.l.b16 %v87
    %v355 = vunpack.c.l.b16 %v88
    %v356 = vunpack.c.l.b16 %v89
    %v357 = vunpack.c.l.b16 %v90
    %v358 = vunpack.c.l.b16 %v91
    %v359 = vunpack.c.l.b16 %v92
    %v360 = vunpack.c.l.b16 %v93
    %v361 = vunpack.c.l.b16 %v94
    %v362 = vunpack.c.l.b16 %v95
    %v363 = vunpack.c.l.b16 %v96
    %v364 = vunpack.c.l.b16 %v97
    %v365 = vunpack.c.l.b16 %v98
    %v366 = vunpack.c.l.b16 %v99
    %v367 = vunpack.c.l.b16 %v100
    %v368 = vunpack.c.l.b16 %v101
    %v369 = vunpack.c.l.b16 %v102
    %v370 = vunpack.c.l.b16 %v103
    %v371 = vunpack.c.l.b16 %v104
    %v372 = vunpack.c.l.b16 %v105
    %v373 = vunpack.c.l.b16 %v106
    %v374 = vunpack.c.l.b16 %v107
    %v375 = vunpack.c.l.b16 %v108
    %v376 = vunpack.c.l.b16 %v109
    %v377 = vunpack.c.l.b16 %v110
    %v378 = vunpack.c.l.b16 %v111
    %v379 = vunpack.c.l.b16 %v112
    %v380 = vunpack.c.l.b16 %v113
    %v381 = vunpack.c.l.b16 %v114
    %v382 = vunpack.c.l.b16 %v115
    %v383 = vunpack.c.l.b16 %v116
    %v384 = vunpack.c.l.b16 %v117
    %v385 = vunpack.c.l.b16 %v118
    %v386 = vunpack.c.l.b16 %v119
    %v387 = vunpack.c.l.b16 %v120
    %v388 = vunpack.c.l.b16 %v121
    %v389 = vunpack.c.l.b16 %v122
    %v390 = vunpack.c.l.b16 %v123
    %v391 = vunpack.c.l.b16 %v124
    %v392 = vunpack.c.l.b16 %v125
    %v393 = vunpack.c.l.b16 %v126
    %v394 = vunpack.c.l.b16 %v127
    %v395 = vunpack.c.l.b16 %v128
    %v396 = vunpack.c.l.b16 %v129
    %v397 = vunpack.c.l.b16 %v130
    %v398 = vunpack.c.l.b16 %v131
    %v399 = vunpack.c.l.b16 %v132
    %v400 = vunpack.c.l.b16 %v133
    %v401 = vunpack.c.l.b16 %v134
    %v402 = vunpack.c.l.b16 %v135
    %v403 = vunpack.c.l.b16 %v136
    %v404 = vunpack.c.l.b16 %v137
    %v405 = vunpack.c.l.b16 %v138
    %v406 = vunpack.c.l.b16 %v139
    %v407 = vunpack.c.l.b16 %v140
    %v408 = vunpack.c.l.b16 %v141
    %v409 = vunpack.c.l.b16 %v142
    %v410 = vunpack.c.l.b16 %v143
    %v411 = vunpack.c.l.b16 %v144
    %v412 = vunpack.c.l.b16 %v145
    %v413 = vunpack.c.l.b16 %v146
    %v414 = vunpack.c.l.b16 %v147
    %v415 = vunpack.c.l.b16 %v148
    %v416 = vunpack.c.l.b16 %v149
    %v417 = vunpack.c.l.b16 %v150
    %v418 = vunpack.c.l.b16 %v151
    %v419 = vunpack.c.l.b16 %v152
    %v420 = vunpack.c.l.b16 %v153
    %v421 = vunpack.c.l.b16 %v154
    %v422 = vunpack.c.l.b16 %v155
    %v423 = vunpack.c.l.b16 %v156
    %v424 = vunpack.c.l.b16 %v157
    %v425 = vunpack.c.l.b16 %v158
    %v426 = vunpack.c.l.b16 %v159
    %v427 = vunpack.c.l.b16 %v160
    %v428 = vunpack.c.l.b16 %v161
    %v429 = vpack.c.b16 %v318, %v317
    %v430 = vpack.c.b16 %v320, %v319
    %v431 = vpack.c.b16 %v322, %v321
    %v432 = vpack.c.b16 %v324, %v323
    %v433 = vpack.c.b16 %v326, %v325
    %v434 = vpack.c.b16 %v328, %v327
    %v435 = vpack.c.b16 %v330, %v329
    %v436 = vpack.c.b16 %v332, %v331
    %v437 = vpack.c.b16 %v334, %v333
    %v438 = vpack.c.b16 %v336, %v335
    %v439 = vpack.c.b16 %v338, %v337
    %v440 = vpack.c.b16 %v340, %v339
    %v441 = vpack.c.b16 %v342, %v341
    %v442 = vpack.c.b16 %v344, %v343
    %v443 = vpack.c.b16 %v346, %v345
    %v444 = vpack.c.b16 %v348, %v347
    %v445 = vpack.c.b16 %v350, %v349
    %v446 = vpack.c.b16 %v352, %v351
    %v447 = vpack.c.b16 %v354, %v353
    %v448 = vpack.c.b16 %v356, %v355
    %v449 = vpack.c.b16 %v358, %v357
    %v450 = vpack.c.b16 %v360, %v359
    %v451 = vpack.c.b16 %v362, %v361
    %v452 = vpack.c.b16 %v364, %v363
    %v453 = vpack.c.b16 %v366, %v365
    %v454 = vpack.c.b16 %v368, %v367
    %v455 = vpack.c.b16 %v370, %v369
    %v456 = vpack.c.b16 %v372, %v371
    %v457 = vpack.c.b16 %v374, %v373
    %v458 = vpack.c.b16 %v376, %v375
    %v459 = vpack.c.b16 %v378, %v377
    %v460 = vpack.c.b16 %v380, %v379
    %v461 = vpack.c.b16 %v382, %v381
    %v462 = vpack.c.b16 %v384, %v383
    %v463 = vpack.c.b16 %v386, %v385
    %v464 = vpack.c.b16 %v388, %v387
    %v465 = vpack.c.b16 %v390, %v389
    %v466 = vpack.c.b16 %v392, %v391
    %v467 = vpack.c.b16 %v394, %v393
    %v468 = vpack.c.b16 %v396, %v395
    %v469 = vpack.c.b16 %v398, %v397
    %v470 = vpack.c.b16 %v400, %v399
    %v471 = vpack.c.b16 %v402, %v401
    %v472 = vpack.c.b16 %v404, %v403
    %v473 = vpack.c.b16 %v406, %v405
    %v474 = vpack.c.b16 %v408, %v407
    %v475 = vpack.c.b16 %v410, %v409
    %v476 = vpack.c.b16 %v412, %v411
    %v477 = vpack.c.b16 %v414, %v413
    %v478 = vpack.c.b16 %v416, %v415
    %v479 = vpack.c.b16 %v418, %v417
    %v480 = vpack.c.b16 %v420, %v419
    %v481 = vpack.c.b16 %v422, %v421
    %v482 = vpack.c.b16 %v424, %v423
    %v483 = vpack.c.b16 %v426, %v425
    %v484 = vpack.c.b16 %v428, %v427
    %541 = vmatprep.subr.bf16.mxu0 0
    %542 = vmatpush1.bf16.msra.mxu0 %v429
    %543 = vmatprep.subr.bf16.mxu0 0
    %544 = vmatpush1.bf16.msra.mxu0 %v430
    %545 = vmatprep.subr.bf16.mxu0 0
    %546 = vmatpush1.bf16.msra.mxu0 %v431
    %547 = vmatprep.subr.bf16.mxu0 0
    %548 = vmatpush1.bf16.msra.mxu0 %v432
    %549 = vmatprep.subr.bf16.mxu0 0
    %550 = vmatpush1.bf16.msra.mxu0 %v433
    %551 = vmatprep.subr.bf16.mxu0 0
    %552 = vmatpush1.bf16.msra.mxu0 %v434
    %553 = vmatprep.subr.bf16.mxu0 0
    %554 = vmatpush1.bf16.msra.mxu0 %v435
    %555 = vmatprep.subr.bf16.mxu0 0
    %556 = vmatpush1.bf16.msra.mxu0 %v436
    %557 = vmatprep.subr.bf16.mxu0 0
    %558 = vmatpush1.bf16.msra.mxu0 %v437
    %559 = vmatprep.subr.bf16.mxu0 0
    %560 = vmatpush1.bf16.msra.mxu0 %v438
    %561 = vmatprep.subr.bf16.mxu0 0
    %562 = vmatpush1.bf16.msra.mxu0 %v439
    %563 = vmatprep.subr.bf16.mxu0 0
    %564 = vmatpush1.bf16.msra.mxu0 %v440
    %565 = vmatprep.subr.bf16.mxu0 0
    %566 = vmatpush1.bf16.msra.mxu0 %v441
    %567 = vmatprep.subr.bf16.mxu0 0
    %568 = vmatpush1.bf16.msra.mxu0 %v442
    %569 = vmatprep.subr.bf16.mxu0 0
    %570 = vmatpush1.bf16.msra.mxu0 %v443
    %571 = vmatprep.subr.bf16.mxu0 0
    %572 = vmatpush1.bf16.msra.mxu0 %v444
    %573 = vmatprep.mubr.bf16.mxu0 %v192
    %574 = vmatmul.mubr.bf16.gmra.mrb[0].mxu0 %v191
    %v575 = vpop.f32.mrb[0].mxu0
    %v576 = vadd.f32 %v167, %v575
    %v577 = vpop.f32.mrb[0].mxu0
    %v578 = vpop.f32.mrb[0].mxu0
    %v579 = vadd.f32 %v167, %v578
    %v580 = vpop.f32.mrb[0].mxu0
    %581 = vdwg.mxu0
    %582 = vmatprep.subr.bf16.mxu0 0
    %583 = vmatpush1.bf16.msra.mxu0 %v445
    %584 = vmatprep.subr.bf16.mxu0 0
    %585 = vmatpush1.bf16.msra.mxu0 %v446
    %586 = vmatprep.subr.bf16.mxu0 0
    %587 = vmatpush1.bf16.msra.mxu0 %v447
    %588 = vmatprep.subr.bf16.mxu0 0
    %589 = vmatpush1.bf16.msra.mxu0 %v448
    %590 = vmatprep.subr.bf16.mxu0 0
    %591 = vmatpush1.bf16.msra.mxu0 %v449
    %592 = vmatprep.subr.bf16.mxu0 0
    %593 = vmatpush1.bf16.msra.mxu0 %v450
    %594 = vmatprep.subr.bf16.mxu0 0
    %595 = vmatpush1.bf16.msra.mxu0 %v451
    %596 = vmatprep.subr.bf16.mxu0 0
    %597 = vmatpush1.bf16.msra.mxu0 %v452
    %598 = vmatprep.subr.bf16.mxu0 0
    %599 = vmatpush1.bf16.msra.mxu0 %v453
    %600 = vmatprep.subr.bf16.mxu0 0
    %601 = vmatpush1.bf16.msra.mxu0 %v454
    %602 = vmatprep.subr.bf16.mxu0 0
    %603 = vmatpush1.bf16.msra.mxu0 %v455
    %604 = vmatprep.subr.bf16.mxu0 0
    %605 = vmatpush1.bf16.msra.mxu0 %v456
    %606 = vmatprep.subr.bf16.mxu0 0
    %607 = vmatpush1.bf16.msra.mxu0 %v457
    %608 = vmatprep.subr.bf16.mxu0 0
    %609 = vmatpush1.bf16.msra.mxu0 %v458
    %610 = vmatprep.subr.bf16.mxu0 0
    %611 = vmatpush1.bf16.msra.mxu0 %v459
    %612 = vmatprep.subr.bf16.mxu0 0
    %613 = vmatpush1.bf16.msra.mxu0 %v460
    %614 = vmatprep.mubr.bf16.mxu0 %v194
    %615 = vmatmul.mubr.bf16.gmra.mrb[0].mxu0 %v193
    %v616 = vpop.f32.mrb[0].mxu0
    %v617 = vadd.f32 %v576, %v616
    %v618 = vpop.f32.mrb[0].mxu0
    %v619 = vpop.f32.mrb[0].mxu0
    %v620 = vadd.f32 %v579, %v619
    %v621 = vpop.f32.mrb[0].mxu0
    %622 = vdwg.mxu0
    %623 = vmatprep.subr.bf16.mxu0 0
    %624 = vmatpush1.bf16.msra.mxu0 %v461
    %625 = vmatprep.subr.bf16.mxu0 0
    %626 = vmatpush1.bf16.msra.mxu0 %v462
    %627 = vmatprep.subr.bf16.mxu0 0
    %628 = vmatpush1.bf16.msra.mxu0 %v463
    %629 = vmatprep.subr.bf16.mxu0 0
    %630 = vmatpush1.bf16.msra.mxu0 %v464
    %631 = vmatprep.subr.bf16.mxu0 0
    %632 = vmatpush1.bf16.msra.mxu0 %v465
    %633 = vmatprep.subr.bf16.mxu0 0
    %634 = vmatpush1.bf16.msra.mxu0 %v466
    %635 = vmatprep.subr.bf16.mxu0 0
    %636 = vmatpush1.bf16.msra.mxu0 %v467
    %637 = vmatprep.subr.bf16.mxu0 0
    %638 = vmatpush1.bf16.msra.mxu0 %v468
    %639 = vmatprep.subr.bf16.mxu0 0
    %640 = vmatpush1.bf16.msra.mxu0 %v469
    %641 = vmatprep.subr.bf16.mxu0 0
    %642 = vmatpush1.bf16.msra.mxu0 %v470
    %643 = vmatprep.subr.bf16.mxu0 0
    %644 = vmatpush1.bf16.msra.mxu0 %v471
    %645 = vmatprep.subr.bf16.mxu0 0
    %646 = vmatpush1.bf16.msra.mxu0 %v472
    %647 = vmatprep.subr.bf16.mxu0 0
    %648 = vmatpush1.bf16.msra.mxu0 %v473
    %649 = vmatprep.subr.bf16.mxu0 0
    %650 = vmatpush1.bf16.msra.mxu0 %v474
    %651 = vmatprep.subr.bf16.mxu0 0
    %652 = vmatpush1.bf16.msra.mxu0 %v475
    %653 = vmatprep.subr.bf16.mxu0 0
    %654 = vmatpush1.bf16.msra.mxu0 %v476
    %655 = vmatprep.mubr.bf16.mxu0 %v196
    %656 = vmatmul.mubr.bf16.gmra.mrb[0].mxu0 %v195
    %v657 = vpop.f32.mrb[0].mxu0
    %v658 = vadd.f32 %v617, %v657
    %v659 = vpop.f32.mrb[0].mxu0
    %v660 = vpop.f32.mrb[0].mxu0
    %v661 = vadd.f32 %v620, %v660
    %v662 = vpop.f32.mrb[0].mxu0
    %663 = vdwg.mxu0
    %664 = vmatprep.subr.bf16.mxu0 0
    %665 = vmatpush1.bf16.msra.mxu0 %v477
    %666 = vmatprep.subr.bf16.mxu0 0
    %667 = vmatpush1.bf16.msra.mxu0 %v478
    %668 = vmatprep.subr.bf16.mxu0 0
    %669 = vmatpush1.bf16.msra.mxu0 %v479
    %670 = vmatprep.subr.bf16.mxu0 0
    %671 = vmatpush1.bf16.msra.mxu0 %v480
    %672 = vmatprep.subr.bf16.mxu0 0
    %673 = vmatpush1.bf16.msra.mxu0 %v481
    %674 = vmatprep.subr.bf16.mxu0 0
    %675 = vmatpush1.bf16.msra.mxu0 %v482
    %676 = vmatprep.subr.bf16.mxu0 0
    %677 = vmatpush1.bf16.msra.mxu0 %v483
    %678 = vmatprep.subr.bf16.mxu0 0
    %679 = vmatpush1.bf16.msra.mxu0 %v484
    %680 = vmatprep.subr.bf16.mxu0 0
    %681 = vmatpush1.bf16.msra.mxu0 0
    %682 = vmatprep.subr.bf16.mxu0 0
    %683 = vmatpush1.bf16.msra.mxu0 0
    %684 = vmatprep.subr.bf16.mxu0 0
    %685 = vmatpush1.bf16.msra.mxu0 0
    %686 = vmatprep.subr.bf16.mxu0 0
    %687 = vmatpush1.bf16.msra.mxu0 0
    %688 = vmatprep.subr.bf16.mxu0 0
    %689 = vmatpush1.bf16.msra.mxu0 0
    %690 = vmatprep.subr.bf16.mxu0 0
    %691 = vmatpush1.bf16.msra.mxu0 0
    %692 = vmatprep.subr.bf16.mxu0 0
    %693 = vmatpush1.bf16.msra.mxu0 0
    %694 = vmatprep.subr.bf16.mxu0 0
    %695 = vmatpush1.bf16.msra.mxu0 0
    %696 = vmatprep.mubr.bf16.mxu0 0
    %697 = vmatmul.mubr.bf16.gmra.mrb[0].mxu0 %v197
    %v698 = vpop.f32.mrb[0].mxu0
    %v699 = vadd.f32 %v658, %v698
    %v700 = vpop.f32.mrb[0].mxu0
    %v701 = vpop.f32.mrb[0].mxu0
    %v702 = vadd.f32 %v661, %v701
    %v703 = vpop.f32.mrb[0].mxu0
    %704 = vdwg.mxu0
    %v705 = vmax.f32 %v699, 0.0
    %v706 = vmax.f32 %v702, 0.0
    %v707 = vpack.c.bf16 %v706, %v705
    %v708 = vld [vmem:[%s3] sm:$0xf]
    %v709 = vld [vmem:[%s3 + $0x4] sm:$0xf]
    %v710 = vld [vmem:[%s3 + $0x8] sm:$0xf]
    %v711 = vld [vmem:[%s3 + $0xc] sm:$0xf]
    %v712 = vld [vmem:[%s3 + $0x10] sm:$0xf]
    %v713 = vld [vmem:[%s3 + $0x14] sm:$0xf]
    %v714 = vld [vmem:[%s3 + $0x18] sm:$0xf]
    %v715 = vld [vmem:[%s3 + $0x1c] sm:$0xf]
    %v716 = vld [vmem:[%s3 + $0x20] sm:$0xf]
    %v717 = vld [vmem:[%s3 + $0x24] sm:$0xf]
    %v718 = vld [vmem:[%s3 + $0x28] sm:$0xf]
    %v719 = vld [vmem:[%s3 + $0x2c] sm:$0xf]
    %v720 = vld [vmem:[%s3 + $0x30] sm:$0xf]
    %v721 = vld [vmem:[%s3 + $0x34] sm:$0xf]
    %v722 = vld [vmem:[%s3 + $0x38] sm:$0xf]
    %v723 = vld [vmem:[%s3 + $0x3c] sm:$0xf]
    %v724 = vld [vmem:[%s4] sm:$0x1]
    %v726 = vlaneseq
    %v727 = vshrl.u32 %v726, 7
    %v728 = vsub.s32 0, %v727
    %v729 = vrot.slane %v724, %v728
    %v747 = vunpack.c.l.b16 %v708
    %v748 = vunpack.c.l.b16 %v709
    %v749 = vunpack.c.l.b16 %v710
    %v750 = vunpack.c.l.b16 %v711
    %v751 = vunpack.c.l.b16 %v712
    %v752 = vunpack.c.l.b16 %v713
    %v753 = vunpack.c.l.b16 %v714
    %v754 = vunpack.c.l.b16 %v715
    %v755 = vunpack.c.l.b16 %v716
    %v756 = vunpack.c.l.b16 %v717
    %v757 = vunpack.c.l.b16 %v718
    %v758 = vunpack.c.l.b16 %v719
    %v759 = vunpack.c.l.b16 %v720
    %v760 = vunpack.c.l.b16 %v721
    %v761 = vunpack.c.l.b16 %v722
    %v762 = vunpack.c.l.b16 %v723
    %v763 = vpack.c.b16 %v748, %v747
    %v764 = vpack.c.b16 %v750, %v749
    %v765 = vpack.c.b16 %v752, %v751
    %v766 = vpack.c.b16 %v754, %v753
    %v767 = vpack.c.b16 %v756, %v755
    %v768 = vpack.c.b16 %v758, %v757
    %v769 = vpack.c.b16 %v760, %v759
    %v770 = vpack.c.b16 %v762, %v761
    %779 = vmatprep.subr.bf16.mxu0 0
    %780 = vmatpush1.bf16.msra.mxu0 %v763
    %781 = vmatprep.subr.bf16.mxu0 0
    %782 = vmatpush1.bf16.msra.mxu0 %v764
    %783 = vmatprep.subr.bf16.mxu0 0
    %784 = vmatpush1.bf16.msra.mxu0 %v765
    %785 = vmatprep.subr.bf16.mxu0 0
    %786 = vmatpush1.bf16.msra.mxu0 %v766
    %787 = vmatprep.subr.bf16.mxu0 0
    %788 = vmatpush1.bf16.msra.mxu0 %v767
    %789 = vmatprep.subr.bf16.mxu0 0
    %790 = vmatpush1.bf16.msra.mxu0 %v768
    %791 = vmatprep.subr.bf16.mxu0 0
    %792 = vmatpush1.bf16.msra.mxu0 %v769
    %793 = vmatprep.subr.bf16.mxu0 0
    %794 = vmatpush1.bf16.msra.mxu0 %v770
    %795 = vmatprep.subr.bf16.mxu0 0
    %796 = vmatpush1.bf16.msra.mxu0 0
    %797 = vmatprep.subr.bf16.mxu0 0
    %798 = vmatpush1.bf16.msra.mxu0 0
    %799 = vmatprep.subr.bf16.mxu0 0
    %800 = vmatpush1.bf16.msra.mxu0 0
    %801 = vmatprep.subr.bf16.mxu0 0
    %802 = vmatpush1.bf16.msra.mxu0 0
    %803 = vmatprep.subr.bf16.mxu0 0
    %804 = vmatpush1.bf16.msra.mxu0 0
    %805 = vmatprep.subr.bf16.mxu0 0
    %806 = vmatpush1.bf16.msra.mxu0 0
    %807 = vmatprep.subr.bf16.mxu0 0
    %808 = vmatpush1.bf16.msra.mxu0 0
    %809 = vmatprep.subr.bf16.mxu0 0
    %810 = vmatpush1.bf16.msra.mxu0 0
    %811 = vmatprep.mubr.bf16.mxu0 0
    %812 = vmatmul.mubr.bf16.gmra.mrb[0].mxu0 %v707
    %v813 = vpop.f32.mrb[0].mxu0
    %v814 = vadd.f32 %v729, %v813
    %v815 = vpop.f32.mrb[0].mxu0
    %v816 = vpop.f32.mrb[0].mxu0
    %v817 = vadd.f32 %v729, %v816
    %v818 = vpop.f32.mrb[0].mxu0
    %819 = vdwg.mxu0
    %v820 = vmax.f32 %v814, 0.0
    %v821 = vmax.f32 %v817, 0.0
    %v822 = vpack.c.bf16 %v821, %v820
    %v823 = vld [vmem:[%s5] sm:$0xf]
    %v824 = vld [vmem:[%s5 + $0x4] sm:$0xf]
    %v825 = vld [vmem:[%s5 + $0x8] sm:$0xf]
    %v826 = vld [vmem:[%s5 + $0xc] sm:$0xf]
    %v827 = vld [vmem:[%s5 + $0x10] sm:$0xf]
    %v828 = vld [vmem:[%s5 + $0x14] sm:$0xf]
    %v829 = vld [vmem:[%s5 + $0x18] sm:$0xf]
    %v830 = vld [vmem:[%s5 + $0x1c] sm:$0xf]
    %v831 = vld [vmem:[%s6] sm:$0x1]
    %v833 = vlaneseq
    %v834 = vshrl.u32 %v833, 7
    %v835 = vsub.s32 0, %v834
    %v836 = vrot.slane %v831, %v835
    %v846 = vunpack.c.l.b16 %v823
    %v847 = vunpack.c.l.b16 %v824
    %v848 = vunpack.c.l.b16 %v825
    %v849 = vunpack.c.l.b16 %v826
    %v850 = vunpack.c.l.b16 %v827
    %v851 = vunpack.c.l.b16 %v828
    %v852 = vunpack.c.l.b16 %v829
    %v853 = vunpack.c.l.b16 %v830
    %v854 = vpack.c.b16 %v847, %v846
    %v855 = vpack.c.b16 %v849, %v848
    %v856 = vpack.c.b16 %v851, %v850
    %v857 = vpack.c.b16 %v853, %v852
    %vm862 = vcmask 523264
    %v864 = vsel %vm862, %v822, 0
    %866 = vmatprep.subr.bf16.mxu0 0
    %867 = vmatpush1.bf16.msra.mxu0 %v854
    %868 = vmatprep.subr.bf16.mxu0 0
    %869 = vmatpush1.bf16.msra.mxu0 %v855
    %870 = vmatprep.subr.bf16.mxu0 0
    %871 = vmatpush1.bf16.msra.mxu0 %v856
    %872 = vmatprep.subr.bf16.mxu0 0
    %873 = vmatpush1.bf16.msra.mxu0 %v857
    %874 = vmatprep.subr.bf16.mxu0 0
    %875 = vmatpush1.bf16.msra.mxu0 0
    %876 = vmatprep.subr.bf16.mxu0 0
    %877 = vmatpush1.bf16.msra.mxu0 0
    %878 = vmatprep.subr.bf16.mxu0 0
    %879 = vmatpush1.bf16.msra.mxu0 0
    %880 = vmatprep.subr.bf16.mxu0 0
    %881 = vmatpush1.bf16.msra.mxu0 0
    %882 = vmatprep.subr.bf16.mxu0 0
    %883 = vmatpush1.bf16.msra.mxu0 0
    %884 = vmatprep.subr.bf16.mxu0 0
    %885 = vmatpush1.bf16.msra.mxu0 0
    %886 = vmatprep.subr.bf16.mxu0 0
    %887 = vmatpush1.bf16.msra.mxu0 0
    %888 = vmatprep.subr.bf16.mxu0 0
    %889 = vmatpush1.bf16.msra.mxu0 0
    %890 = vmatprep.subr.bf16.mxu0 0
    %891 = vmatpush1.bf16.msra.mxu0 0
    %892 = vmatprep.subr.bf16.mxu0 0
    %893 = vmatpush1.bf16.msra.mxu0 0
    %894 = vmatprep.subr.bf16.mxu0 0
    %895 = vmatpush1.bf16.msra.mxu0 0
    %896 = vmatprep.subr.bf16.mxu0 0
    %897 = vmatpush1.bf16.msra.mxu0 0
    %898 = vmatprep.mubr.bf16.mxu0 0
    %899 = vmatmul.mubr.bf16.gmra.mrb[0].mxu0 %v864
    %v900 = vpop.f32.mrb[0].mxu0
    %v901 = vadd.f32 %v836, %v900
    %v902 = vpop.f32.mrb[0].mxu0
    %v903 = vpop.f32.mrb[0].mxu0
    %v904 = vadd.f32 %v836, %v903
    %v905 = vpop.f32.mrb[0].mxu0
    %906 = vdwg.mxu0
    %907 = vst [vmem:[#allocation5] sm:$0xff] %v901
    %908 = vst [vmem:[#allocation5 + $0x8] sm:$0xff] %v904
    // Predicated region
    $region34: #{tpu_custom_call.1} parent=1 // pred_check
      _
    $region35: #{tpu_custom_call.1} parent=1 // pred_check_branch
      %910 = sbr.rel (0) target = $region37
    $region36: #{tpu_custom_call.1} parent=1 // pred_region
      %s912 = ssub.s32 256, 256
      %913 = vsyncadd [#allocation4], %s912
      %s914 = sshll.u32 [#allocation5], 4
      %s915 = int_to_ptr.vmem [resolvable:$true] %s914
      %920 = dma.vmem_to_hbm [thread:$0]  %s915, 256, %s7, [#allocation4], 128, 128, 8
    $region37: #{tpu_custom_call.1} parent=1 // pred_fallthru
      _
    // Predicated region
    $region38: #{tpu_custom_call.1} parent=1 // pred_check
      _
    $region39: #{tpu_custom_call.1} parent=1 // pred_check_branch
      %922 = sbr.rel (0) target = $region41
    $region40: #{tpu_custom_call.1} parent=1 // pred_region
      %923 = dma.done [#allocation4], 256
    $region41: #{tpu_custom_call.1} parent=1 // pred_fallthru
      _
    %924 = vsyncpa [#allocation3], 1
    %925 = vsyncpa [#allocation4], 1

</llo_original>
